<compile_context>
chip_gen: v7x
topology: tpu7x:2x2x1
jax: 0.10.0
libtpu: 0.0.40
codegen_flags: <defaults>
</compile_context>

<pallas_src>
import jax
import jax.numpy as jnp
from jax.experimental import pallas as pl
from jax.experimental.pallas import tpu as pltpu


def mlp_kernel(x_ref, w1_ref, b1_ref, w2_ref, b2_ref, o_ref):
    # x_ref : [1, TB]    batch tile on the lane axis (lane-dense load)
    # w1_ref: [node, 1]  pre-scaled (0.5*W1), resident across the batch grid
    # b1_ref: [node, 1]  pre-scaled (0.5*b1), resident
    # w2_ref: [node, 1]  pre-scaled (0.25*W2), resident
    # b2_ref: (1, 1)     folded bias in SMEM (scalar read)
    # o_ref : [1, TB]    lane-dense store
    x = x_ref[...]                                               # [1, TB]

    # layer 1: degenerate K=1 matmul -> VPU broadcast multiply-add,
    # sigmoid folded into a single tanh (scales already in w1/b1).
    t1 = jnp.tanh(w1_ref[...] * x + b1_ref[...])                 # [node, TB]  (EUP)

    # layer 2: degenerate N=1 matmul -> weighted cross-sublane reduce (XLU),
    # output sigmoid as one tanh + cheap VALU scale/offset.
    z2 = jnp.sum(w2_ref[...] * t1, axis=0, keepdims=True) + b2_ref[0, 0]   # [1, TB]
    o_ref[...] = 0.5 * jnp.tanh(z2) + 0.5


def net_forward(x, w1_col, b1_col, w2_col, b2, *, tb=512):
    """x: [B, 1] (batch-major, torch-style). Returns [B, 1]."""
    B, in_features = x.shape
    node = w1_col.shape[0]
    out_features = w2_col.shape[1]
    assert in_features == 1 and out_features == 1   # Net hard-codes 1-D in/out
    assert tb % 128 == 0                            # keep lane-dense tiles

    # One-time constant folding of the tanh-form sigmoid into the tiny weight
    # vectors (operates on [node,1] params, not per-element input work).
    w1h = (0.5 * w1_col).astype(jnp.float32)                     # [node, 1]
    b1h = (0.5 * b1_col).astype(jnp.float32)                     # [node, 1]
    w2h = (0.25 * w2_col).astype(jnp.float32)                    # [node, 1]
    b2h = (0.25 * jnp.sum(w2_col) + 0.5 * b2).reshape(1, 1).astype(jnp.float32)

    grid_b = pl.cdiv(B, tb)
    b_pad = grid_b * tb
    if b_pad == B:
        # Free reshape (contiguous, one dim is 1): no extra HBM pass over x.
        xt = x[:, 0].reshape(1, B).astype(jnp.float32)
    else:
        # Pad only when B is not a tile multiple; padded lanes compute garbage
        # that is sliced away below (keep the out_t[0, :B] slice invariant).
        xt = jnp.zeros((1, b_pad), jnp.float32).at[0, :B].set(x[:, 0])

    cost = pl.CostEstimate(
        flops=4 * node * b_pad,              # 2 layers of mul+add over [node, B]
        transcendentals=(node + 1) * b_pad,  # one tanh per hidden elem + one per output
        bytes_accessed=8 * b_pad + 12 * node + 4,
    )

    out_t = pl.pallas_call(
        mlp_kernel,
        out_shape=jax.ShapeDtypeStruct((1, b_pad), jnp.float32),
        grid=(grid_b,),
        in_specs=[
            pl.BlockSpec((1, tb), lambda i: (0, i)),        # x: batch tile (lane-dense)
            pl.BlockSpec((node, 1), lambda i: (0, 0)),      # w1 (resident, no re-DMA)
            pl.BlockSpec((node, 1), lambda i: (0, 0)),      # b1 (resident)
            pl.BlockSpec((node, 1), lambda i: (0, 0)),      # w2 (resident)
            pl.BlockSpec(memory_space=pltpu.MemorySpace.SMEM),  # b2 scalar in SMEM
        ],
        out_specs=pl.BlockSpec((1, tb), lambda i: (0, i)),
        compiler_params=pltpu.CompilerParams(
            # Shard across v7x's two TensorCores only when there are enough
            # batch tiles to amortize the split; tiny grids stay "arbitrary".
            dimension_semantics=("parallel",) if grid_b >= 4 else ("arbitrary",),
        ),
        cost_estimate=cost,
    )(xt, w1h, b1h, w2h, b2h)

    return out_t[0, :B].reshape(B, out_features)


def init_params(key, input_size, node, output_size):
    # Deterministic synthetic init (uniform, like PyTorch's default Linear init),
    # stored in "column" layout: features on the sublane axis so the kernel can
    # broadcast against the [1, TB] lane-major batch tile.
    k1, k2, k3, k4 = jax.random.split(key, 4)
    bound1 = 1.0 / jnp.sqrt(jnp.float32(input_size))
    bound2 = 1.0 / jnp.sqrt(jnp.float32(node))
    w1_col = jax.random.uniform(k1, (node, input_size), jnp.float32, -bound1, bound1)   # == torch linear1.weight
    b1_col = jax.random.uniform(k2, (node, 1), jnp.float32, -bound1, bound1)
    w2_col = jax.random.uniform(k3, (node, output_size), jnp.float32, -bound2, bound2)  # == torch linear2.weight.T
    b2 = jax.random.uniform(k4, (1, output_size), jnp.float32, -bound2, bound2)
    return w1_col, b1_col, w2_col, b2


def net_forward_ref(x, w1_col, b1_col, w2_col, b2):
    # Exact torch semantics, batch-major: linear(x) = x @ W.T + b
    a1 = jax.nn.sigmoid(x @ w1_col.T + b1_col[:, 0])     # [B, node]
    return jax.nn.sigmoid(a1 @ w2_col + b2[0])           # [B, 1]


if __name__ == "__main__":
    input_size, node, output_size = 1, 32, 1
    B = 512  # one lane-dense 512-wide batch tile -> grid of a single step

    key = jax.random.PRNGKey(0)
    kx, kp = jax.random.split(key)
    x = jax.random.normal(kx, (B, input_size), jnp.float32)
    w1_col, b1_col, w2_col, b2 = init_params(kp, input_size, node, output_size)

    yhat = net_forward(x, w1_col, b1_col, w2_col, b2)
    yhat = jax.block_until_ready(yhat)

    ref = net_forward_ref(x, w1_col, b1_col, w2_col, b2)
    assert yhat.shape == (B, output_size)
    # Exact tanh-form sigmoid (no approx reciprocal) -> only ULP-level differences
    # between the EUP tanh and XLA's logistic are expected.
    assert jnp.allclose(yhat, ref, atol=1e-4, rtol=1e-4), float(jnp.max(jnp.abs(yhat - ref)))

    print("KERNEL_OK")
</pallas_src>

<mosaic_0001>
module attributes {stable_mosaic.version = 11 : i64} {
  func.func @mlp_kernel(%arg0: i32, %arg1: memref<1x512xf32, #tpu.memory_space<vmem>>, %arg2: memref<32x1xf32, #tpu.memory_space<vmem>>, %arg3: memref<32x1xf32, #tpu.memory_space<vmem>>, %arg4: memref<32x1xf32, #tpu.memory_space<vmem>>, %arg5: memref<1x1xf32, #tpu.memory_space<smem>>, %arg6: memref<1x512xf32, #tpu.memory_space<vmem>>) attributes {dimension_semantics = [#tpu.dimension_semantics<arbitrary>], iteration_bounds = array<i64: 1>, scalar_prefetch = 0 : i64, scratch_operands = 0 : i64, tpu.core_type = #tpu.core_type<tc>, window_params = [{transform_indices = @transform_0, window_bounds = array<i64: 1, 512>}, {pipeline_mode = #tpu.pipeline_mode<synchronous>, transform_indices = @transform_1, window_bounds = array<i64: 32, 1>}, {pipeline_mode = #tpu.pipeline_mode<synchronous>, transform_indices = @transform_2, window_bounds = array<i64: 32, 1>}, {pipeline_mode = #tpu.pipeline_mode<synchronous>, transform_indices = @transform_3, window_bounds = array<i64: 32, 1>}, {transform_indices = @transform_4, window_bounds = array<i64: 1, 1>}, {transform_indices = @transform_5, window_bounds = array<i64: 1, 512>}]} {
    %c0 = arith.constant 0 : index
    %c0_0 = arith.constant 0 : index
    %0 = vector.load %arg1[%c0, %c0_0] : memref<1x512xf32, #tpu.memory_space<vmem>>, vector<1x512xf32>
    %c0_1 = arith.constant 0 : index
    %c0_2 = arith.constant 0 : index
    %1 = vector.load %arg2[%c0_1, %c0_2] : memref<32x1xf32, #tpu.memory_space<vmem>>, vector<32x1xf32>
    %2 = vector.broadcast %1 : vector<32x1xf32> to vector<32x512xf32>
    %3 = vector.broadcast %0 : vector<1x512xf32> to vector<32x512xf32>
    %4 = arith.mulf %2, %3 : vector<32x512xf32>
    %c0_3 = arith.constant 0 : index
    %c0_4 = arith.constant 0 : index
    %5 = vector.load %arg3[%c0_3, %c0_4] : memref<32x1xf32, #tpu.memory_space<vmem>>, vector<32x1xf32>
    %6 = vector.broadcast %5 : vector<32x1xf32> to vector<32x512xf32>
    %7 = arith.addf %4, %6 : vector<32x512xf32>
    %8 = math.tanh %7 : vector<32x512xf32>
    %c0_5 = arith.constant 0 : index
    %c0_6 = arith.constant 0 : index
    %9 = vector.load %arg4[%c0_5, %c0_6] : memref<32x1xf32, #tpu.memory_space<vmem>>, vector<32x1xf32>
    %10 = vector.broadcast %9 : vector<32x1xf32> to vector<32x512xf32>
    %11 = arith.mulf %10, %8 : vector<32x512xf32>
    %cst = arith.constant dense<0.000000e+00> : vector<512xf32>
    %12 = vector.multi_reduction <add>, %11, %cst [0] : vector<32x512xf32> to vector<512xf32>
    %13 = vector.shape_cast %12 : vector<512xf32> to vector<1x512xf32>
    %c0_7 = arith.constant 0 : index
    %c0_8 = arith.constant 0 : index
    %14 = memref.load %arg5[%c0_7, %c0_8] : memref<1x1xf32, #tpu.memory_space<smem>>
    %15 = vector.broadcast %14 : f32 to vector<1x512xf32>
    %16 = arith.addf %13, %15 : vector<1x512xf32>
    %17 = math.tanh %16 : vector<1x512xf32>
    %cst_9 = arith.constant 5.000000e-01 : f32
    %18 = vector.broadcast %cst_9 : f32 to vector<1x512xf32>
    %19 = arith.mulf %18, %17 : vector<1x512xf32>
    %cst_10 = arith.constant 5.000000e-01 : f32
    %20 = vector.broadcast %cst_10 : f32 to vector<1x512xf32>
    %21 = arith.addf %19, %20 : vector<1x512xf32>
    %c0_11 = arith.constant 0 : index
    %c0_12 = arith.constant 0 : index
    %22 = vector.load %arg6[%c0_11, %c0_12] : memref<1x512xf32, #tpu.memory_space<vmem>>, vector<1x512xf32>
    tpu.vector_store %arg6[%c0_11, %c0_12], %21 {strides = array<i32>} : memref<1x512xf32, #tpu.memory_space<vmem>>, vector<1x512xf32>,
    return
  }
  func.func @transform_0(%arg0: i32) -> (i32, i32) {
    %c0_i32 = arith.constant 0 : i32
    %c0_i32_0 = arith.constant 0 : i32
    return %c0_i32, %arg0 : i32, i32
  }
  func.func @transform_1(%arg0: i32) -> (i32, i32) {
    %c0_i32 = arith.constant 0 : i32
    %c0_i32_0 = arith.constant 0 : i32
    %c0_i32_1 = arith.constant 0 : i32
    return %c0_i32, %c0_i32_0 : i32, i32
  }
  func.func @transform_2(%arg0: i32) -> (i32, i32) {
    %c0_i32 = arith.constant 0 : i32
    %c0_i32_0 = arith.constant 0 : i32
    %c0_i32_1 = arith.constant 0 : i32
    return %c0_i32, %c0_i32_0 : i32, i32
  }
  func.func @transform_3(%arg0: i32) -> (i32, i32) {
    %c0_i32 = arith.constant 0 : i32
    %c0_i32_0 = arith.constant 0 : i32
    %c0_i32_1 = arith.constant 0 : i32
    return %c0_i32, %c0_i32_0 : i32, i32
  }
  func.func @transform_4(%arg0: i32) -> (i32, i32) {
    %c0_i32 = arith.constant 0 : i32
    %c0_i32_0 = arith.constant 0 : i32
    %c0_i32_1 = arith.constant 0 : i32
    return %c0_i32, %c0_i32_0 : i32, i32
  }
  func.func @transform_5(%arg0: i32) -> (i32, i32) {
    %c0_i32 = arith.constant 0 : i32
    %c0_i32_0 = arith.constant 0 : i32
    return %c0_i32, %arg0 : i32, i32
  }
}

</mosaic_0001>

<llo_original>
// kernel: tpu_custom_call.1
$region0: #{tpu_custom_call.1}
  #allocation0 [shape = 'u32[]', space=smem, size = 0x4, offset = 0x4, fixed_abs, tag = 'smem constant byte address 0x4 - core index']
  #allocation1 [shape = 'u32[144,128]{1,0:T(1,128)}', space=vmem, size = 0x12000, scoped, tag = 'internal scratch']
  #allocation2 [shape = 'f32[1,1]{1,0:T(1,128)S(6)}', space=smem, size = 0x200, scoped, tag = 'scoped memory for tpu_custom_call.1']
  %s0 = inlined_call_operand.vmem [shape: f32[1,512], index: 0, kind: input, shape index: {}]
  %s1 = inlined_call_operand.vmem [shape: f32[32,1], index: 1, kind: input, shape index: {}]
  %s2 = inlined_call_operand.vmem [shape: f32[32,1], index: 2, kind: input, shape index: {}]
  %s3 = inlined_call_operand.vmem [shape: f32[32,1], index: 3, kind: input, shape index: {}]
  %s4 = inlined_call_operand.<no memory space> [shape: f32[1,1], index: 4, kind: input, shape index: {}]
  %s5 = inlined_call_operand.hbm [shape: f32[1,512], index: 5, kind: output, shape index: {}]
  %s6 = sld [smem:[#allocation0]]
  $region30: #{tpu_custom_call.1} parent=0
    _
  %s8 = ssub.s32 1, %s6
  %s9 = scalar_select 0, %s8, %s6
  %10 = sst [smem:[#allocation2]] %s4
  $region1: #{tpu_custom_call.1} parent=0
    #allocation3 [shape = 'u8[2048]{0}', space=vmem, size = 0x800, scoped, tag = 'output window, operand 0, single buffered']
    #allocation4 [shape = 's32[1]{0}', space=sflag, size = 0x4, scoped, tag = 'scoped memory for tpu_custom_call.1']
    %11 = vsyncpa [#allocation4], 0
    // Predicated region
    $region2: #{tpu_custom_call.1} parent=1 // pred_check
      _
    $region3: #{tpu_custom_call.1} parent=1 // pred_check_branch
      %13 = sbr.rel (0) target = $region5
    $region4: #{tpu_custom_call.1} parent=1 // pred_region
      _
    $region5: #{tpu_custom_call.1} parent=1 // pred_fallthru
      _
    // Predicated region
    $region6: #{tpu_custom_call.1} parent=1 // pred_check
      _
    $region7: #{tpu_custom_call.1} parent=1 // pred_check_branch
      %15 = sbr.rel (0) target = $region9
    $region8: #{tpu_custom_call.1} parent=1 // pred_region
      _
    $region9: #{tpu_custom_call.1} parent=1 // pred_fallthru
      _
    // Predicated region
    $region10: #{tpu_custom_call.1} parent=1 // pred_check
      _
    $region11: #{tpu_custom_call.1} parent=1 // pred_check_branch
      %17 = sbr.rel (0) target = $region13
    $region12: #{tpu_custom_call.1} parent=1 // pred_region
      _
    $region13: #{tpu_custom_call.1} parent=1 // pred_fallthru
      _
    // Predicated region
    $region14: #{tpu_custom_call.1} parent=1 // pred_check
      _
    $region15: #{tpu_custom_call.1} parent=1 // pred_check_branch
      %19 = sbr.rel (0) target = $region17
    $region16: #{tpu_custom_call.1} parent=1 // pred_region
      _
    $region17: #{tpu_custom_call.1} parent=1 // pred_fallthru
      _
    // Predicated region
    $region18: #{tpu_custom_call.1} parent=1 // pred_check
      _
    $region19: #{tpu_custom_call.1} parent=1 // pred_check_branch
      %21 = sbr.rel (0) target = $region21
    $region20: #{tpu_custom_call.1} parent=1 // pred_region
      _
    $region21: #{tpu_custom_call.1} parent=1 // pred_fallthru
      _
    %v22 = vld [vmem:[%s0] sm:$0xf]
    %v23 = vld [vmem:[%s1] sm:$0xff]
    %v24 = vld [vmem:[%s1 + $0x8] sm:$0xff]
    %v25 = vld [vmem:[%s1 + $0x10] sm:$0xff]
    %v26 = vld [vmem:[%s1 + $0x18] sm:$0xff]
    %28 = vset.pattern.permute.xlu0 0
    %29 = vperm.xlu0 %28, %v23
    %v30 = vpop.permute.xlu0 %29
    %33 = vset.pattern.permute.xlu0 0
    %34 = vperm.xlu0 %33, %v24
    %v35 = vpop.permute.xlu0 %34
    %38 = vset.pattern.permute.xlu0 0
    %39 = vperm.xlu0 %38, %v25
    %v40 = vpop.permute.xlu0 %39
    %43 = vset.pattern.permute.xlu0 0
    %44 = vperm.xlu0 %43, %v26
    %v45 = vpop.permute.xlu0 %44
    %v48 = vlaneseq
    %v49 = vshrl.u32 %v48, 7
    %v50 = vsub.s32 0, %v49
    %v51 = vrot.slane %v22, %v50
    %v52 = vlaneseq
    %v53 = vshrl.u32 %v52, 7
    %v54 = vsub.s32 1, %v53
    %v55 = vrot.slane %v22, %v54
    %v56 = vlaneseq
    %v57 = vshrl.u32 %v56, 7
    %v58 = vsub.s32 2, %v57
    %v59 = vrot.slane %v22, %v58
    %v60 = vlaneseq
    %v61 = vshrl.u32 %v60, 7
    %v62 = vsub.s32 3, %v61
    %v63 = vrot.slane %v22, %v62
    %v68 = vmul.f32 %v30, %v51
    %v69 = vmul.f32 %v30, %v55
    %v70 = vmul.f32 %v30, %v59
    %v71 = vmul.f32 %v30, %v63
    %v72 = vmul.f32 %v35, %v51
    %v73 = vmul.f32 %v35, %v55
    %v74 = vmul.f32 %v35, %v59
    %v75 = vmul.f32 %v35, %v63
    %v76 = vmul.f32 %v40, %v51
    %v77 = vmul.f32 %v40, %v55
    %v78 = vmul.f32 %v40, %v59
    %v79 = vmul.f32 %v40, %v63
    %v80 = vmul.f32 %v45, %v51
    %v81 = vmul.f32 %v45, %v55
    %v82 = vmul.f32 %v45, %v59
    %v83 = vmul.f32 %v45, %v63
    %v84 = vld [vmem:[%s2] sm:$0xff]
    %v85 = vld [vmem:[%s2 + $0x8] sm:$0xff]
    %v86 = vld [vmem:[%s2 + $0x10] sm:$0xff]
    %v87 = vld [vmem:[%s2 + $0x18] sm:$0xff]
    %89 = vset.pattern.permute.xlu0 0
    %90 = vperm.xlu0 %89, %v84
    %v91 = vpop.permute.xlu0 %90
    %94 = vset.pattern.permute.xlu0 0
    %95 = vperm.xlu0 %94, %v85
    %v96 = vpop.permute.xlu0 %95
    %99 = vset.pattern.permute.xlu0 0
    %100 = vperm.xlu0 %99, %v86
    %v101 = vpop.permute.xlu0 %100
    %104 = vset.pattern.permute.xlu0 0
    %105 = vperm.xlu0 %104, %v87
    %v106 = vpop.permute.xlu0 %105
    %v108 = vadd.f32 %v68, %v91
    %v109 = vadd.f32 %v69, %v91
    %v110 = vadd.f32 %v70, %v91
    %v111 = vadd.f32 %v71, %v91
    %v112 = vadd.f32 %v72, %v96
    %v113 = vadd.f32 %v73, %v96
    %v114 = vadd.f32 %v74, %v96
    %v115 = vadd.f32 %v75, %v96
    %v116 = vadd.f32 %v76, %v101
    %v117 = vadd.f32 %v77, %v101
    %v118 = vadd.f32 %v78, %v101
    %v119 = vadd.f32 %v79, %v101
    %v120 = vadd.f32 %v80, %v106
    %v121 = vadd.f32 %v81, %v106
    %v122 = vadd.f32 %v82, %v106
    %v123 = vadd.f32 %v83, %v106
    %v124 = vtanh.pop %v108
    %v125 = vtanh.pop %v109
    %v126 = vtanh.pop %v110
    %v127 = vtanh.pop %v111
    %v128 = vtanh.pop %v112
    %v129 = vtanh.pop %v113
    %v130 = vtanh.pop %v114
    %v131 = vtanh.pop %v115
    %v132 = vtanh.pop %v116
    %v133 = vtanh.pop %v117
    %v134 = vtanh.pop %v118
    %v135 = vtanh.pop %v119
    %v136 = vtanh.pop %v120
    %v137 = vtanh.pop %v121
    %v138 = vtanh.pop %v122
    %v139 = vtanh.pop %v123
    %v140 = vld [vmem:[%s3] sm:$0xff]
    %v141 = vld [vmem:[%s3 + $0x8] sm:$0xff]
    %v142 = vld [vmem:[%s3 + $0x10] sm:$0xff]
    %v143 = vld [vmem:[%s3 + $0x18] sm:$0xff]
    %145 = vset.pattern.permute.xlu0 0
    %146 = vperm.xlu0 %145, %v140
    %v147 = vpop.permute.xlu0 %146
    %150 = vset.pattern.permute.xlu0 0
    %151 = vperm.xlu0 %150, %v141
    %v152 = vpop.permute.xlu0 %151
    %155 = vset.pattern.permute.xlu0 0
    %156 = vperm.xlu0 %155, %v142
    %v157 = vpop.permute.xlu0 %156
    %160 = vset.pattern.permute.xlu0 0
    %161 = vperm.xlu0 %160, %v143
    %v162 = vpop.permute.xlu0 %161
    %v164 = vmul.f32 %v147, %v124
    %v165 = vmul.f32 %v147, %v125
    %v166 = vmul.f32 %v147, %v126
    %v167 = vmul.f32 %v147, %v127
    %v168 = vmul.f32 %v152, %v128
    %v169 = vmul.f32 %v152, %v129
    %v170 = vmul.f32 %v152, %v130
    %v171 = vmul.f32 %v152, %v131
    %v172 = vmul.f32 %v157, %v132
    %v173 = vmul.f32 %v157, %v133
    %v174 = vmul.f32 %v157, %v134
    %v175 = vmul.f32 %v157, %v135
    %v176 = vmul.f32 %v162, %v136
    %v177 = vmul.f32 %v162, %v137
    %v178 = vmul.f32 %v162, %v138
    %v179 = vmul.f32 %v162, %v139
    %v180 = vadd.f32 %v164, %v168
    %v181 = vadd.f32 %v180, %v172
    %v182 = vadd.f32 %v181, %v176
    %v183 = vrot.slane %v182, 4
    %v184 = vadd.f32 %v182, %v183
    %v185 = vrot.slane %v184, 2
    %v186 = vadd.f32 %v184, %v185
    %v187 = vrot.slane %v186, 1
    %v188 = vadd.f32 %v186, %v187
    %v189 = vadd.f32 %v165, %v169
    %v190 = vadd.f32 %v189, %v173
    %v191 = vadd.f32 %v190, %v177
    %v192 = vrot.slane %v191, 4
    %v193 = vadd.f32 %v191, %v192
    %v194 = vrot.slane %v193, 2
    %v195 = vadd.f32 %v193, %v194
    %v196 = vrot.slane %v195, 1
    %v197 = vadd.f32 %v195, %v196
    %v198 = vadd.f32 %v166, %v170
    %v199 = vadd.f32 %v198, %v174
    %v200 = vadd.f32 %v199, %v178
    %v201 = vrot.slane %v200, 4
    %v202 = vadd.f32 %v200, %v201
    %v203 = vrot.slane %v202, 2
    %v204 = vadd.f32 %v202, %v203
    %v205 = vrot.slane %v204, 1
    %v206 = vadd.f32 %v204, %v205
    %v207 = vadd.f32 %v167, %v171
    %v208 = vadd.f32 %v207, %v175
    %v209 = vadd.f32 %v208, %v179
    %v210 = vrot.slane %v209, 4
    %v211 = vadd.f32 %v209, %v210
    %v212 = vrot.slane %v211, 2
    %v213 = vadd.f32 %v211, %v212
    %v214 = vrot.slane %v213, 1
    %v215 = vadd.f32 %v213, %v214
    %s216 = sld [smem:[#allocation2]]
    %v217 = vstv %s216
    %v218 = vadd.f32 %v188, %v217
    %v219 = vadd.f32 %v197, %v217
    %v220 = vadd.f32 %v206, %v217
    %v221 = vadd.f32 %v215, %v217
    %v222 = vtanh.pop %v218
    %v223 = vtanh.pop %v219
    %v224 = vtanh.pop %v220
    %v225 = vtanh.pop %v221
    %v226 = vmul.f32 %v222, 0.5
    %v227 = vmul.f32 %v223, 0.5
    %v228 = vmul.f32 %v224, 0.5
    %v229 = vmul.f32 %v225, 0.5
    %v230 = vadd.f32 %v226, 0.5
    %v231 = vadd.f32 %v227, 0.5
    %v232 = vadd.f32 %v228, 0.5
    %v233 = vadd.f32 %v229, 0.5
    %v238 = vcombine.low %v230, %v231
    %v239 = vcombine.low %v232, %v233
    %v241 = vunpack.c.l.s4 1966171168
    %v242 = vunpack.c.0.s8 %v241
    %v243 = vlaneseq
    %v244 = vshrl.u32 %v243, 7
    %v245 = vsub.s32 %v242, %v244
    %v246 = vrot.slane %v238, %v245
    %v248 = vunpack.c.l.s4 1966171168
    %v249 = vunpack.c.0.s8 %v248
    %v250 = vlaneseq
    %v251 = vshrl.u32 %v250, 7
    %v252 = vsub.s32 %v249, %v251
    %v253 = vrot.slane %v239, %v252
    %v254 = vcombine.low %v246, %v253
    %v256 = vunpack.c.l.s4 1966171168
    %v257 = vunpack.c.0.s8 %v256
    %v258 = vlaneseq
    %v259 = vshrl.u32 %v258, 7
    %v260 = vsub.s32 %v257, %v259
    %v261 = vrot.slane %v254, %v260
    %v263 = vlaneseq
    %vm264 = vcmp.ge.s32.totalorder %v263, 0
    %vm265 = vcmp.lt.s32.totalorder %v263, 512
    %vm266 = vmand %vm264, %vm265
    %267 = vst.msk [vmem:[#allocation3] sm:$0xf] %vm266, %v261
    // Predicated region
    $region22: #{tpu_custom_call.1} parent=1 // pred_check
      _
    $region23: #{tpu_custom_call.1} parent=1 // pred_check_branch
      %269 = sbr.rel (0) target = $region25
    $region24: #{tpu_custom_call.1} parent=1 // pred_region
      %s271 = ssub.s32 64, 64
      %272 = vsyncadd [#allocation4], %s271
      %s274 = sshll.u32 [#allocation3], 4
      %s275 = int_to_ptr.vmem [resolvable:$true] %s274
      %277 = dma.vmem_to_hbm [thread:$0]  %s275, 64, %s5, [#allocation4]
    $region25: #{tpu_custom_call.1} parent=1 // pred_fallthru
      _
    // Predicated region
    $region26: #{tpu_custom_call.1} parent=1 // pred_check
      _
    $region27: #{tpu_custom_call.1} parent=1 // pred_check_branch
      %279 = sbr.rel (0) target = $region29
    $region28: #{tpu_custom_call.1} parent=1 // pred_region
      %280 = dma.done [#allocation4], 64
    $region29: #{tpu_custom_call.1} parent=1 // pred_fallthru
      _
    %281 = vsyncpa [#allocation4], 1

</llo_original>
